<compile_context>
chip_gen: v7x
topology: tpu7x:2x2x1
jax: 0.10.0
libtpu: 0.0.40
codegen_flags: <defaults>
</compile_context>

<pallas_src>
import functools

import jax
import jax.numpy as jnp
from jax.experimental import pallas as pl
from jax.experimental.pallas import tpu as pltpu


def _round_up(x, m):
    return ((x + m - 1) // m) * m


def _tree_combine(vals, op):
    """Pairwise (tree) reduction: ceil(log2 K) dependency depth."""
    vals = list(vals)
    while len(vals) > 1:
        nxt = [op(vals[i], vals[i + 1]) for i in range(0, len(vals) - 1, 2)]
        if len(vals) % 2:
            nxt.append(vals[-1])
        vals = nxt
    return vals[0]


def _mean_kernel(*refs, num_components, inv_k):
    """refs = (x_0, ..., x_{K-1}, out); each is a lane-dense (TR, W) tile."""
    K = num_components
    o_ref = refs[K]

    def load(k):
        return refs[k][...].astype(jnp.float32)

    # First tree level pairs loads so they are consumed as soon as possible.
    lvl = [load(2 * i) + load(2 * i + 1) for i in range(K // 2)]
    if K % 2:
        lvl.append(load(K - 1))
    acc = _tree_combine(lvl, lambda a, b: a + b)
    o_ref[...] = (acc * inv_k).astype(o_ref.dtype)


def _att_kernel(s_ref, e_ref, *refs, num_components):
    """Component-attention pooling on packed rows.

    s_ref: (W, g) block-diagonal score matrix,  S = kron(I_g, w_col)
    e_ref: (g, W) block-diagonal expansion,     E = kron(I_g, ones(1, D))
    refs = (x_0, ..., x_{K-1}, out); each a lane-dense (TR, W) tile packing
    g batch rows of width D per slab row.
    """
    K = num_components
    o_ref = refs[K]
    S = s_ref[...]
    E = e_ref[...]
    hi = jax.lax.Precision.HIGHEST  # keep f32 accuracy through the MXU

    # Pass 1: per packed-batch-row scores (one small MXU matmul per input).
    scores = [
        jnp.dot(refs[k][...].astype(jnp.float32), S,
                precision=hi, preferred_element_type=jnp.float32)   # (TR, g)
        for k in range(K)
    ]
    m = _tree_combine(scores, jnp.maximum)
    es = [jnp.exp(s - m) for s in scores]
    denom = _tree_combine(es, lambda a, b: a + b)
    inv = 1.0 / denom  # exact: the kernel is HBM-bound, approx rcp buys nothing

    # Pass 2: expand probabilities back onto their D lanes and accumulate.
    # Inputs are re-read from their VMEM blocks (cheap: 3 vld slots/cycle);
    # serial accumulation keeps only ~2 full-width f32 tiles live.
    acc = None
    for k in range(K):
        p_full = jnp.dot(es[k] * inv, E,
                         precision=hi, preferred_element_type=jnp.float32)  # (TR, W)
        term = p_full * refs[k][...].astype(jnp.float32)
        acc = term if acc is None else acc + term
    o_ref[...] = acc.astype(o_ref.dtype)


def naive_teacher_forward(logits_list, att_weight=None, *,
                          lane_target=512,
                          vmem_budget_bytes=16 << 20,
                          max_rows_per_block=None,
                          min_grid_steps=2):
    """NaiveTeacher.forward.

    att_weight=None            -> pooling_type='mean' (module default)
    att_weight of shape (1, D) -> pooling_type='att'  (ComponentAttention)
    """
    K = len(logits_list)
    B, D = logits_list[0].shape
    dtype = logits_list[0].dtype
    itemsize = jnp.dtype(dtype).itemsize            # true dtype (bf16 == 2)

    # --- lane-dense packing plan -------------------------------------------
    # Pack g consecutive batch rows per slab row so the last (lane) dim is
    # ~lane_target wide instead of D.
    g = max(1, lane_target // D)
    W = g * D
    R = pl.cdiv(B, g)                               # packed slab rows

    # Row tile from the VMEM budget: (K inputs + 1 output) double-buffered,
    # lane-padded width, true dtype.
    per_row_bytes = 2 * (K + 1) * _round_up(W, 128) * itemsize
    tr = max(8, vmem_budget_bytes // per_row_bytes)
    tr = max(8, (tr // 8) * 8)
    if max_rows_per_block is not None:
        tr = max(8, min(tr, (max_rows_per_block // 8) * 8))
    if min_grid_steps > 1 and R >= 8 * min_grid_steps:
        # >=2 grid steps so the 'parallel' axis shards across both TCs on v7x.
        tr = min(tr, _round_up(pl.cdiv(R, min_grid_steps), 8))
    # TODO(synk): add a second (lane-axis) grid dimension for very wide D,
    # where even an 8-row block would exceed the VMEM budget.

    if tr >= R:
        TR, Rp = R, R                               # single full-extent block
    else:
        TR = tr
        Rp = _round_up(R, TR)
    Bp = Rp * g
    grid = (Rp // TR,)

    def pack(x):
        if Bp != B:
            x = jnp.pad(x, ((0, Bp - B), (0, 0)))
        return x.reshape(Rp, W)                     # contiguous: free reshape

    xs = [pack(x) for x in logits_list]

    x_spec = pl.BlockSpec((TR, W), lambda r: (r, 0))
    out_spec = pl.BlockSpec((TR, W), lambda r: (r, 0))

    # vmem_limit: actual double-buffered block bytes (+ S/E + headroom for
    # in-kernel f32 temporaries); v7x-safe with the default 16 MiB budget.
    block_bytes = 2 * (K + 1) * TR * _round_up(W, 128) * itemsize
    extra = 0 if att_weight is None else 2 * 2 * (W * g + g * W) * 4
    vmem_limit = int(min(max(block_bytes + extra + (6 << 20), 16 << 20), 64 << 20))
    cparams = pltpu.CompilerParams(
        dimension_semantics=("parallel",),
        vmem_limit_bytes=vmem_limit,
    )

    if att_weight is None:
        kernel = functools.partial(_mean_kernel, num_components=K, inv_k=1.0 / K)
        out = pl.pallas_call(
            kernel,
            out_shape=jax.ShapeDtypeStruct((Rp, W), dtype),
            grid=grid,
            in_specs=[x_spec] * K,
            out_specs=out_spec,
            compiler_params=cparams,
        )(*xs)
    else:
        w = att_weight.reshape(-1).astype(jnp.float32)              # (D,)
        eye_g = jnp.eye(g, dtype=jnp.float32)
        S = jnp.kron(eye_g, w[:, None])                             # (W, g)
        E = jnp.kron(eye_g, jnp.ones((1, D), jnp.float32))          # (g, W)
        s_spec = pl.BlockSpec((W, g), lambda r: (0, 0))             # DMA'd once
        e_spec = pl.BlockSpec((g, W), lambda r: (0, 0))
        kernel = functools.partial(_att_kernel, num_components=K)
        out = pl.pallas_call(
            kernel,
            out_shape=jax.ShapeDtypeStruct((Rp, W), dtype),
            grid=grid,
            in_specs=[s_spec, e_spec] + [x_spec] * K,
            out_specs=out_spec,
            compiler_params=cparams,
        )(S, E, *xs)

    out = out.reshape(Bp, D)
    if Bp != B:
        out = out[:B]
    return jnp.squeeze(out)   # torch .squeeze(): drop size-1 dims


def _reference(logits_list, att_weight=None):
    x = jnp.stack(logits_list, axis=1)                      # (B, K, D)
    if att_weight is None:
        return jnp.squeeze(x.mean(axis=1))
    s = jnp.sum(x * att_weight.reshape(-1), axis=-1)        # (B, K), exact f32
    p = jax.nn.softmax(s, axis=1)
    return jnp.squeeze(jnp.sum(p[..., None] * x, axis=1))


if __name__ == "__main__":
    key = jax.random.PRNGKey(0)
    B, K, D = 2, 3, 8  # batch, num component logits, feature/class dim
    k1, k2 = jax.random.split(key)
    logits_list = [
        jax.random.normal(jax.random.fold_in(k1, i), (B, D), dtype=jnp.float32)
        for i in range(K)
    ]
    # deterministic Linear(D, 1, bias=False) weight for the 'att' variant
    att_weight = jax.random.normal(k2, (1, D), dtype=jnp.float32) * 0.1

    # pooling_type='mean' (module default) and pooling_type='att'
    z_mean = jax.block_until_ready(naive_teacher_forward(logits_list))
    z_att = jax.block_until_ready(naive_teacher_forward(logits_list, att_weight))

    ref_mean = _reference(logits_list)
    ref_att = _reference(logits_list, att_weight)
    assert z_mean.shape == (B, D) and z_att.shape == (B, D)
    assert jnp.allclose(z_mean, ref_mean, atol=1e-5, rtol=1e-5)
    assert jnp.allclose(z_att, ref_att, atol=1e-5, rtol=1e-5)

    # Multi-block (tiled + zero-padded) batch path: packed rows > one row
    # tile, so the grid has several steps.
    B2 = 4000
    logits_list2 = [
        jax.random.normal(jax.random.fold_in(k1, 100 + i), (B2, D), dtype=jnp.float32)
        for i in range(K)
    ]
    z2_mean = jax.block_until_ready(naive_teacher_forward(logits_list2))
    z2_att = jax.block_until_ready(naive_teacher_forward(logits_list2, att_weight))
    assert jnp.allclose(z2_mean, _reference(logits_list2), atol=1e-5, rtol=1e-5)
    assert jnp.allclose(z2_att, _reference(logits_list2, att_weight),
                        atol=1e-5, rtol=1e-5)

    # Deeper grid with forced small row blocks (exercises index_map + padding).
    z3_att = jax.block_until_ready(
        naive_teacher_forward(logits_list2, att_weight, max_rows_per_block=8))
    assert jnp.allclose(z3_att, _reference(logits_list2, att_weight),
                        atol=1e-5, rtol=1e-5)

    print("KERNEL_OK")
</pallas_src>

<mosaic_0001>
module attributes {stable_mosaic.version = 11 : i64} {
  func.func @_mean_kernel(%arg0: i32, %arg1: memref<1x512xf32, #tpu.memory_space<vmem>>, %arg2: memref<1x512xf32, #tpu.memory_space<vmem>>, %arg3: memref<1x512xf32, #tpu.memory_space<vmem>>, %arg4: memref<1x512xf32, #tpu.memory_space<vmem>>) attributes {dimension_semantics = [#tpu.dimension_semantics<parallel>], iteration_bounds = array<i64: 1>, scalar_prefetch = 0 : i64, scratch_operands = 0 : i64, tpu.core_type = #tpu.core_type<tc>, window_params = [{transform_indices = @transform_0, window_bounds = array<i64: 1, 512>}, {transform_indices = @transform_1, window_bounds = array<i64: 1, 512>}, {transform_indices = @transform_2, window_bounds = array<i64: 1, 512>}, {transform_indices = @transform_3, window_bounds = array<i64: 1, 512>}]} {
    %c0 = arith.constant 0 : index
    %c0_0 = arith.constant 0 : index
    %0 = vector.load %arg1[%c0, %c0_0] : memref<1x512xf32, #tpu.memory_space<vmem>>, vector<1x512xf32>
    %c0_1 = arith.constant 0 : index
    %c0_2 = arith.constant 0 : index
    %1 = vector.load %arg2[%c0_1, %c0_2] : memref<1x512xf32, #tpu.memory_space<vmem>>, vector<1x512xf32>
    %2 = arith.addf %0, %1 : vector<1x512xf32>
    %c0_3 = arith.constant 0 : index
    %c0_4 = arith.constant 0 : index
    %3 = vector.load %arg3[%c0_3, %c0_4] : memref<1x512xf32, #tpu.memory_space<vmem>>, vector<1x512xf32>
    %4 = arith.addf %2, %3 : vector<1x512xf32>
    %cst = arith.constant 0.333333343 : f32
    %5 = vector.broadcast %cst : f32 to vector<1x512xf32>
    %6 = arith.mulf %4, %5 : vector<1x512xf32>
    %c0_5 = arith.constant 0 : index
    %c0_6 = arith.constant 0 : index
    %7 = vector.load %arg4[%c0_5, %c0_6] : memref<1x512xf32, #tpu.memory_space<vmem>>, vector<1x512xf32>
    tpu.vector_store %arg4[%c0_5, %c0_6], %6 {strides = array<i32>} : memref<1x512xf32, #tpu.memory_space<vmem>>, vector<1x512xf32>,
    return
  }
  func.func @transform_0(%arg0: i32) -> (i32, i32) {
    %c0_i32 = arith.constant 0 : i32
    %c0_i32_0 = arith.constant 0 : i32
    return %arg0, %c0_i32 : i32, i32
  }
  func.func @transform_1(%arg0: i32) -> (i32, i32) {
    %c0_i32 = arith.constant 0 : i32
    %c0_i32_0 = arith.constant 0 : i32
    return %arg0, %c0_i32 : i32, i32
  }
  func.func @transform_2(%arg0: i32) -> (i32, i32) {
    %c0_i32 = arith.constant 0 : i32
    %c0_i32_0 = arith.constant 0 : i32
    return %arg0, %c0_i32 : i32, i32
  }
  func.func @transform_3(%arg0: i32) -> (i32, i32) {
    %c0_i32 = arith.constant 0 : i32
    %c0_i32_0 = arith.constant 0 : i32
    return %arg0, %c0_i32 : i32, i32
  }
}

</mosaic_0001>

<llo_original>
// kernel: tpu_custom_call.1
$region0: #{tpu_custom_call.1}
  #allocation0 [shape = 'u32[]', space=smem, size = 0x4, offset = 0x4, fixed_abs, tag = 'smem constant byte address 0x4 - core index']
  #allocation1 [shape = 'u32[144,128]{1,0:T(1,128)}', space=vmem, size = 0x12000, scoped, tag = 'internal scratch']
  %s0 = inlined_call_operand.hbm [shape: f32[1,512], index: 0, kind: input, shape index: {}]
  %s1 = inlined_call_operand.hbm [shape: f32[1,512], index: 1, kind: input, shape index: {}]
  %s2 = inlined_call_operand.vmem [shape: f32[1,512], index: 2, kind: input, shape index: {}]
  %s3 = inlined_call_operand.hbm [shape: f32[1,512], index: 3, kind: output, shape index: {}]
  %s4 = sld [smem:[#allocation0]]
  $region30: #{tpu_custom_call.1} parent=0
    _
  %s6 = ssub.s32 1, %s4
  %s7 = scalar_select 0, %s6, %s4
  $region1: #{tpu_custom_call.1} parent=0
    #allocation2 [shape = 'u8[2048]{0}', space=vmem, size = 0x800, scoped, tag = 'input window, operand 0, single buffered']
    #allocation3 [shape = 's32[1]{0}', space=sflag, size = 0x4, scoped, tag = 'scoped memory for tpu_custom_call.1']
    #allocation4 [shape = 's32[1]{0}', space=sflag, size = 0x4, scoped, tag = 'scoped memory for tpu_custom_call.1']
    #allocation5 [shape = 'u8[2048]{0}', space=vmem, size = 0x800, scoped, tag = 'input window, operand 1, single buffered']
    #allocation6 [shape = 's32[1]{0}', space=sflag, size = 0x4, scoped, tag = 'scoped memory for tpu_custom_call.1']
    #allocation7 [shape = 'u8[2048]{0}', space=vmem, size = 0x800, scoped, tag = 'output window, operand 0, single buffered']
    %8 = vsyncpa [#allocation3], 0
    %9 = vsyncpa [#allocation6], 0
    %10 = vsyncpa [#allocation4], 0
    // Predicated region
    $region2: #{tpu_custom_call.1} parent=1 // pred_check
      _
    $region3: #{tpu_custom_call.1} parent=1 // pred_check_branch
      %12 = sbr.rel (0) target = $region5
    $region4: #{tpu_custom_call.1} parent=1 // pred_region
      %s14 = ssub.s32 64, 64
      %15 = vsyncadd [#allocation3], %s14
      %s17 = sshll.u32 [#allocation2], 4
      %s18 = int_to_ptr.vmem [resolvable:$true] %s17
      %20 = dma.hbm_to_vmem [thread:$0]  %s0, 64, %s18, [#allocation3]
    $region5: #{tpu_custom_call.1} parent=1 // pred_fallthru
      _
    // Predicated region
    $region6: #{tpu_custom_call.1} parent=1 // pred_check
      _
    $region7: #{tpu_custom_call.1} parent=1 // pred_check_branch
      %22 = sbr.rel (0) target = $region9
    $region8: #{tpu_custom_call.1} parent=1 // pred_region
      %s24 = ssub.s32 64, 64
      %25 = vsyncadd [#allocation6], %s24
      %s27 = sshll.u32 [#allocation5], 4
      %s28 = int_to_ptr.vmem [resolvable:$true] %s27
      %30 = dma.hbm_to_vmem [thread:$0]  %s1, 64, %s28, [#allocation6]
    $region9: #{tpu_custom_call.1} parent=1 // pred_fallthru
      _
    // Predicated region
    $region10: #{tpu_custom_call.1} parent=1 // pred_check
      _
    $region11: #{tpu_custom_call.1} parent=1 // pred_check_branch
      %32 = sbr.rel (0) target = $region13
    $region12: #{tpu_custom_call.1} parent=1 // pred_region
      _
    $region13: #{tpu_custom_call.1} parent=1 // pred_fallthru
      _
    // Predicated region
    $region14: #{tpu_custom_call.1} parent=1 // pred_check
      _
    $region15: #{tpu_custom_call.1} parent=1 // pred_check_branch
      %34 = sbr.rel (0) target = $region17
    $region16: #{tpu_custom_call.1} parent=1 // pred_region
      %35 = dma.done [#allocation3], 64
    $region17: #{tpu_custom_call.1} parent=1 // pred_fallthru
      _
    // Predicated region
    $region18: #{tpu_custom_call.1} parent=1 // pred_check
      _
    $region19: #{tpu_custom_call.1} parent=1 // pred_check_branch
      %37 = sbr.rel (0) target = $region21
    $region20: #{tpu_custom_call.1} parent=1 // pred_region
      %38 = dma.done [#allocation6], 64
    $region21: #{tpu_custom_call.1} parent=1 // pred_fallthru
      _
    %v39 = vld [vmem:[#allocation2] sm:$0xf]
    %v40 = vld [vmem:[#allocation5] sm:$0xf]
    %v41 = vadd.f32 %v39, %v40
    %v42 = vld [vmem:[%s2] sm:$0xf]
    %v43 = vadd.f32 %v41, %v42
    %v44 = vmul.f32 %v43, 0.33333334
    %v45 = vlaneseq
    %vm46 = vcmp.ge.s32.totalorder %v45, 0
    %vm47 = vcmp.lt.s32.totalorder %v45, 512
    %vm48 = vmand %vm46, %vm47
    %49 = vst.msk [vmem:[#allocation7] sm:$0xf] %vm48, %v44
    // Predicated region
    $region22: #{tpu_custom_call.1} parent=1 // pred_check
      _
    $region23: #{tpu_custom_call.1} parent=1 // pred_check_branch
      %51 = sbr.rel (0) target = $region25
    $region24: #{tpu_custom_call.1} parent=1 // pred_region
      %s53 = ssub.s32 64, 64
      %54 = vsyncadd [#allocation4], %s53
      %s56 = sshll.u32 [#allocation7], 4
      %s57 = int_to_ptr.vmem [resolvable:$true] %s56
      %59 = dma.vmem_to_hbm [thread:$0]  %s57, 64, %s3, [#allocation4]
    $region25: #{tpu_custom_call.1} parent=1 // pred_fallthru
      _
    // Predicated region
    $region26: #{tpu_custom_call.1} parent=1 // pred_check
      _
    $region27: #{tpu_custom_call.1} parent=1 // pred_check_branch
      %61 = sbr.rel (0) target = $region29
    $region28: #{tpu_custom_call.1} parent=1 // pred_region
      %62 = dma.done [#allocation4], 64
    $region29: #{tpu_custom_call.1} parent=1 // pred_fallthru
      _
    %63 = vsyncpa [#allocation3], 1
    %64 = vsyncpa [#allocation6], 1
    %65 = vsyncpa [#allocation4], 1

</llo_original>
